<compile_context>
chip_gen: v6e
topology: v6e:2x2x1
jax: 0.10.0
libtpu: 0.0.40
codegen_flags: <defaults>
</compile_context>

<pallas_src>
import functools

import jax
import jax.numpy as jnp
from jax.experimental import pallas as pl
from jax.experimental.pallas import tpu as pltpu

_TIME_CHUNK = 8        # timesteps folded into one grid step (fully unrolled)
_MAX_BATCH_TILE = 128  # batch-tile size once B_pad exceeds 128 (v7x megacore)


def _round_up(x, m):
    return ((x + m - 1) // m) * m


def _rnn_policy_kernel(obs_ref, h0_ref, w1_ref, b1_ref, wrzn_ref, brzn_ref,
                       whn_ref, bhn_ref, w2_ref, b2_ref,
                       q_ref, h_ref, h_all_ref,
                       *, hidden_dim, t_real, needs_mask):
    f32 = jnp.float32
    bf16 = jnp.bfloat16
    H = hidden_dim
    t_chunk, b_t, feat = obs_ref.shape
    out_pad = q_ref.shape[-1]
    chunk = pl.program_id(1)            # time-chunk axis (innermost grid axis)

    # h_ref (resident output block, constant block index along time) is the
    # recurrent carry; initialize from h0 at the first chunk of each batch tile.
    @pl.when(chunk == 0)
    def _():
        h_ref[...] = h0_ref[...]

    # ---- fc1 + ReLU for the WHOLE chunk in one matmul (off the recurrent
    #      critical path; t_chunk x better MXU sublane fill than per-step). ----
    obs = obs_ref[...].reshape(t_chunk * b_t, feat).astype(bf16)
    x_all = jnp.dot(obs, w1_ref[...], preferred_element_type=f32) + b1_ref[...]
    x_all = jnp.maximum(x_all, 0.0)                       # (t_chunk*b_t, H) f32

    # Hoist weight loads and bias broadcasts out of the recurrence
    # (JAX does not CSE broadcast_in_dim).
    wrzn = wrzn_ref[...]                                  # (2H, 3H) bf16
    whn = whn_ref[...]                                    # (H, H)   bf16
    brzn = jnp.broadcast_to(brzn_ref[...], (b_t, 3 * H))  # f32, folded b_ih+b_hh
    bhn = jnp.broadcast_to(bhn_ref[...], (b_t, H))        # f32

    # ---- recurrent chain: only 2 small matmuls per step ----
    h = h_ref[...]                                        # (b_t, H) f32 carry
    for i in range(t_chunk):                              # fully unrolled
        x_i = x_all[i * b_t:(i + 1) * b_t]                # (b_t, H) f32
        h_bf = h.astype(bf16)
        inp = jnp.concatenate([x_i, h], axis=-1).astype(bf16)   # (b_t, 2H)
        rzn = jnp.dot(inp, wrzn, preferred_element_type=f32) + brzn   # (b_t, 3H)
        gh_n = jnp.dot(h_bf, whn, preferred_element_type=f32) + bhn   # (b_t, H)
        r = jax.nn.sigmoid(rzn[:, :H])
        z = jax.nn.sigmoid(rzn[:, H:2 * H])
        n = jnp.tanh(rzn[:, 2 * H:] + r * gh_n)
        h_new = (1.0 - z) * n + z * h
        if needs_mask:                                    # static python flag
            valid = (chunk * t_chunk + i) < t_real
            h_new = jnp.where(valid, h_new, h)
        h = h_new
        h_all_ref[i] = h                                  # stash for fused fc2

    h_ref[...] = h

    # ---- fc2 + clamp for the WHOLE chunk in one matmul, lane-dense store ----
    h_flat = h_all_ref[...].reshape(t_chunk * b_t, H).astype(bf16)
    q = jnp.dot(h_flat, w2_ref[...], preferred_element_type=f32) + b2_ref[...]
    q = jnp.clip(q, -5.0, 2.0)
    q_ref[...] = q.reshape(t_chunk, b_t, out_pad).astype(q_ref.dtype)


def _prep_params(params, hidden_dim, n_actions, out_pad):
    """Repack PyTorch-layout params into kernel layout (x @ W, fused gates, bf16)."""
    H = hidden_dim
    f32, bf16 = jnp.float32, jnp.bfloat16

    w1 = params["fc1_w"].T.astype(bf16)                   # [F, H]
    b1 = params["fc1_b"].reshape(1, H).astype(f32)

    w_ih = params["gru_w_ih"].astype(f32)                 # [3H, H], rows r|z|n
    w_hh = params["gru_w_hh"].astype(f32)
    b_ih = params["gru_b_ih"].astype(f32)                 # [3H]
    b_hh = params["gru_b_hh"].astype(f32)

    # Fused (r, z, gi_n)-from-[x | h] weight: x-rows are W_ih.T, h-rows are
    # W_hh.T with the n-gate columns zeroed (gh_n is applied separately
    # because of the r * gh_n term).
    w_hh_t_rz = w_hh.T.at[:, 2 * H:].set(0.0)             # [H, 3H]
    wrzn = jnp.concatenate([w_ih.T, w_hh_t_rz], axis=0).astype(bf16)   # [2H, 3H]
    brzn = (b_ih + jnp.concatenate([b_hh[:2 * H], jnp.zeros((H,), f32)])
            ).reshape(1, 3 * H).astype(f32)

    whn = w_hh[2 * H:, :].T.astype(bf16)                  # [H, H]
    bhn = b_hh[2 * H:].reshape(1, H).astype(f32)

    w2 = jnp.zeros((H, out_pad), bf16).at[:, :n_actions].set(
        params["fc2_w"].T.astype(bf16))
    b2 = jnp.zeros((1, out_pad), f32).at[:, :n_actions].set(
        params["fc2_b"].astype(f32))
    return w1, b1, wrzn, brzn, whn, bhn, w2, b2


@functools.partial(jax.jit, static_argnames=("hidden_dim", "n_actions"))
def rnn_policy_rollout(obs_seq, hidden_state, params, *, hidden_dim, n_actions):
    """Fused T-step rollout.  obs_seq: [T, B, F]; returns (q [T,B,A], h [B,H])."""
    T, B, F = obs_seq.shape
    H = hidden_dim

    t_chunk = min(_TIME_CHUNK, T)
    T_pad = _round_up(T, t_chunk)
    B_pad = _round_up(B, 8)
    if B_pad > _MAX_BATCH_TILE:
        B_pad = _round_up(B_pad, _MAX_BATCH_TILE)
        b_tile = _MAX_BATCH_TILE
    else:
        b_tile = B_pad
    n_b = B_pad // b_tile
    n_t = T_pad // t_chunk
    out_pad = _round_up(n_actions, 128)                   # lane-dense q slab

    w1, b1, wrzn, brzn, whn, bhn, w2, b2 = _prep_params(params, H, n_actions, out_pad)

    # Only pad obs when strictly needed (avoids a full extra HBM pass).
    obs_f = obs_seq.astype(jnp.float32)
    if (T_pad != T) or (B_pad != B):
        obs_p = jnp.zeros((T_pad, B_pad, F), jnp.float32).at[:T, :B, :].set(obs_f)
    else:
        obs_p = obs_f
    # h0 buffer is tiny; always make a fresh padded copy so aliasing is safe.
    h0 = hidden_state.reshape(-1, H).astype(jnp.float32)
    h0_p = jnp.zeros((B_pad, H), jnp.float32).at[:B, :].set(h0)

    kernel = functools.partial(_rnn_policy_kernel, hidden_dim=H,
                               t_real=T, needs_mask=(T_pad != T))

    grid_spec = pltpu.PrefetchScalarGridSpec(
        num_scalar_prefetch=0,
        grid=(n_b, n_t),
        in_specs=[
            pl.BlockSpec((t_chunk, b_tile, F), lambda b, t: (t, b, 0)),  # obs chunk
            pl.BlockSpec((b_tile, H), lambda b, t: (b, 0)),              # h0
            pl.BlockSpec((F, H), lambda b, t: (0, 0)),                   # w1 (bf16)
            pl.BlockSpec((1, H), lambda b, t: (0, 0)),                   # b1
            pl.BlockSpec((2 * H, 3 * H), lambda b, t: (0, 0)),           # fused rzn W
            pl.BlockSpec((1, 3 * H), lambda b, t: (0, 0)),               # fused rzn b
            pl.BlockSpec((H, H), lambda b, t: (0, 0)),                   # W_hh_n
            pl.BlockSpec((1, H), lambda b, t: (0, 0)),                   # b_hh_n
            pl.BlockSpec((H, out_pad), lambda b, t: (0, 0)),             # w2 (padded)
            pl.BlockSpec((1, out_pad), lambda b, t: (0, 0)),             # b2 (padded)
        ],
        out_specs=(
            pl.BlockSpec((t_chunk, b_tile, out_pad), lambda b, t: (t, b, 0)),  # q
            pl.BlockSpec((b_tile, H), lambda b, t: (b, 0)),                    # h carry
        ),
        scratch_shapes=[pltpu.VMEM((t_chunk, b_tile, H), jnp.float32)],  # per-step h
    )

    q_pad, h_out = pl.pallas_call(
        kernel,
        out_shape=(
            jax.ShapeDtypeStruct((T_pad, B_pad, out_pad), jnp.float32),
            jax.ShapeDtypeStruct((B_pad, H), jnp.float32),
        ),
        grid_spec=grid_spec,
        input_output_aliases={1: 1},                       # h0 -> h_out in place
        compiler_params=pltpu.CompilerParams(
            dimension_semantics=("parallel", "arbitrary")),  # batch || , time carry
    )(obs_p, h0_p, w1, b1, wrzn, brzn, whn, bhn, w2, b2)

    return q_pad[:T, :B, :n_actions], h_out[:B]


def rnn_policy_forward(obs, hidden_state, params, *, hidden_dim, n_actions):
    """Single-step forward matching the PyTorch module: (obs, h) -> (q, h)."""
    q_seq, h_out = rnn_policy_rollout(obs[None], hidden_state, params,
                                      hidden_dim=hidden_dim, n_actions=n_actions)
    return q_seq[0], h_out


def init_params(key, input_shape, hidden_dim, n_actions):
    """Deterministic synthetic parameters with PyTorch-native shapes."""
    ks = jax.random.split(key, 8)
    scale = 0.1
    return {
        "fc1_w": scale * jax.random.normal(ks[0], (hidden_dim, input_shape), jnp.float32),
        "fc1_b": scale * jax.random.normal(ks[1], (hidden_dim,), jnp.float32),
        "gru_w_ih": scale * jax.random.normal(ks[2], (3 * hidden_dim, hidden_dim), jnp.float32),
        "gru_b_ih": scale * jax.random.normal(ks[3], (3 * hidden_dim,), jnp.float32),
        "gru_w_hh": scale * jax.random.normal(ks[4], (3 * hidden_dim, hidden_dim), jnp.float32),
        "gru_b_hh": scale * jax.random.normal(ks[5], (3 * hidden_dim,), jnp.float32),
        "fc2_w": scale * jax.random.normal(ks[6], (n_actions, hidden_dim), jnp.float32),
        "fc2_b": scale * jax.random.normal(ks[7], (n_actions,), jnp.float32),
    }


def reference_forward(obs, hidden_state, params, *, hidden_dim):
    """Pure-JAX f32 reference replicating the PyTorch forward exactly."""
    H = hidden_dim
    x = jnp.maximum(obs @ params["fc1_w"].T + params["fc1_b"], 0.0)
    h_in = hidden_state.reshape(-1, H)
    gi = x @ params["gru_w_ih"].T + params["gru_b_ih"]
    gh = h_in @ params["gru_w_hh"].T + params["gru_b_hh"]
    r = jax.nn.sigmoid(gi[:, :H] + gh[:, :H])
    z = jax.nn.sigmoid(gi[:, H:2 * H] + gh[:, H:2 * H])
    n = jnp.tanh(gi[:, 2 * H:] + r * gh[:, 2 * H:])
    h = (1.0 - z) * n + z * h_in
    q = h @ params["fc2_w"].T + params["fc2_b"]
    return jnp.clip(q, -5.0, 2.0), h


def reference_rollout(obs_seq, hidden_state, params, *, hidden_dim):
    h = hidden_state.reshape(-1, hidden_dim)
    qs = []
    for t in range(obs_seq.shape[0]):
        q, h = reference_forward(obs_seq[t], h, params, hidden_dim=hidden_dim)
        qs.append(q)
    return jnp.stack(qs), h


if __name__ == "__main__":
    INPUT_SHAPE = 32      # obs feature dim
    HIDDEN = 32           # args.rnn_hidden_dim
    N_ACTIONS = 8         # args.n_actions

    key = jax.random.PRNGKey(0)
    k_p, k_obs, k_h, k_seq, k_h2, k_seq3, k_h3 = jax.random.split(key, 7)
    params = init_params(k_p, INPUT_SHAPE, HIDDEN, N_ACTIONS)

    # --- single step (module-equivalent forward); B=4 exercises batch padding ---
    B1 = 4
    obs = jax.random.normal(k_obs, (B1, INPUT_SHAPE), jnp.float32)
    hidden = jax.random.normal(k_h, (B1, HIDDEN), jnp.float32)
    q, h_out = rnn_policy_forward(obs, hidden, params,
                                  hidden_dim=HIDDEN, n_actions=N_ACTIONS)
    jax.block_until_ready((q, h_out))
    q_r, h_r = reference_forward(obs, hidden, params, hidden_dim=HIDDEN)
    assert q.shape == (B1, N_ACTIONS) and h_out.shape == (B1, HIDDEN)
    assert jnp.allclose(q, q_r, atol=2e-2), "single-step q mismatch vs reference"
    assert jnp.allclose(h_out, h_r, atol=2e-2), "single-step h mismatch vs reference"

    # --- fused rollout with aligned shapes (no padding copies): T=16, B=8 ---
    B2, T2 = 8, 16
    obs_seq = jax.random.normal(k_seq, (T2, B2, INPUT_SHAPE), jnp.float32)
    hidden2 = jax.random.normal(k_h2, (B2, HIDDEN), jnp.float32)
    q_seq, h_T = rnn_policy_rollout(obs_seq, hidden2, params,
                                    hidden_dim=HIDDEN, n_actions=N_ACTIONS)
    jax.block_until_ready((q_seq, h_T))
    q_seq_r, h_T_r = reference_rollout(obs_seq, hidden2, params, hidden_dim=HIDDEN)
    assert q_seq.shape == (T2, B2, N_ACTIONS) and h_T.shape == (B2, HIDDEN)
    assert jnp.allclose(q_seq, q_seq_r, atol=5e-2), "rollout q mismatch vs reference"
    assert jnp.allclose(h_T, h_T_r, atol=5e-2), "rollout h mismatch vs reference"

    # --- ragged rollout (T=13 not a chunk multiple, B=4 not a sublane multiple):
    #     exercises the in-kernel time mask and padded batch rows ---
    B3, T3 = 4, 13
    obs_seq3 = jax.random.normal(k_seq3, (T3, B3, INPUT_SHAPE), jnp.float32)
    hidden3 = jax.random.normal(k_h3, (B3, HIDDEN), jnp.float32)
    q3, h3 = rnn_policy_rollout(obs_seq3, hidden3, params,
                                hidden_dim=HIDDEN, n_actions=N_ACTIONS)
    jax.block_until_ready((q3, h3))
    q3_r, h3_r = reference_rollout(obs_seq3, hidden3, params, hidden_dim=HIDDEN)
    assert q3.shape == (T3, B3, N_ACTIONS) and h3.shape == (B3, HIDDEN)
    assert jnp.allclose(q3, q3_r, atol=5e-2), "ragged rollout q mismatch vs reference"
    assert jnp.allclose(h3, h3_r, atol=5e-2), "ragged rollout h mismatch vs reference"

    print("KERNEL_OK")
</pallas_src>

<mosaic_0001>
module attributes {stable_mosaic.version = 11 : i64} {
  func.func @_rnn_policy_kernel(%arg0: i32, %arg1: i32, %arg2: memref<1x8x32xf32, #tpu.memory_space<vmem>>, %arg3: memref<8x32xf32, #tpu.memory_space<vmem>>, %arg4: memref<32x32xbf16, #tpu.memory_space<vmem>>, %arg5: memref<1x32xf32, #tpu.memory_space<vmem>>, %arg6: memref<64x96xbf16, #tpu.memory_space<vmem>>, %arg7: memref<1x96xf32, #tpu.memory_space<vmem>>, %arg8: memref<32x32xbf16, #tpu.memory_space<vmem>>, %arg9: memref<1x32xf32, #tpu.memory_space<vmem>>, %arg10: memref<32x128xbf16, #tpu.memory_space<vmem>>, %arg11: memref<1x128xf32, #tpu.memory_space<vmem>>, %arg12: memref<1x8x128xf32, #tpu.memory_space<vmem>>, %arg13: memref<8x32xf32, #tpu.memory_space<vmem>>, %arg14: memref<1x8x32xf32, #tpu.memory_space<vmem>>) attributes {dimension_semantics = [#tpu.dimension_semantics<parallel>, #tpu.dimension_semantics<arbitrary>], iteration_bounds = array<i64: 1, 1>, scalar_prefetch = 0 : i64, scratch_operands = 1 : i64, tpu.core_type = #tpu.core_type<tc>, window_params = [{transform_indices = @transform_0, window_bounds = array<i64: 1, 8, 32>}, {transform_indices = @transform_1, window_bounds = array<i64: 8, 32>}, {pipeline_mode = #tpu.pipeline_mode<synchronous>, transform_indices = @transform_2, window_bounds = array<i64: 32, 32>}, {pipeline_mode = #tpu.pipeline_mode<synchronous>, transform_indices = @transform_3, window_bounds = array<i64: 1, 32>}, {pipeline_mode = #tpu.pipeline_mode<synchronous>, transform_indices = @transform_4, window_bounds = array<i64: 64, 96>}, {pipeline_mode = #tpu.pipeline_mode<synchronous>, transform_indices = @transform_5, window_bounds = array<i64: 1, 96>}, {pipeline_mode = #tpu.pipeline_mode<synchronous>, transform_indices = @transform_6, window_bounds = array<i64: 32, 32>}, {pipeline_mode = #tpu.pipeline_mode<synchronous>, transform_indices = @transform_7, window_bounds = array<i64: 1, 32>}, {pipeline_mode = #tpu.pipeline_mode<synchronous>, transform_indices = @transform_8, window_bounds = array<i64: 32, 128>}, {pipeline_mode = #tpu.pipeline_mode<synchronous>, transform_indices = @transform_9, window_bounds = array<i64: 1, 128>}, {transform_indices = @transform_10, window_bounds = array<i64: 1, 8, 128>}, {transform_indices = @transform_11, window_bounds = array<i64: 8, 32>}]} {
    %c0_i32 = arith.constant 0 : i32
    %0 = arith.cmpi eq, %arg1, %c0_i32 : i32
    %1 = arith.extui %0 : i1 to i32
    %c0_i32_0 = arith.constant 0 : i32
    %2 = arith.cmpi ne, %1, %c0_i32_0 : i32
    scf.if %2 {
      %c0_41 = arith.constant 0 : index
      %c0_42 = arith.constant 0 : index
      %68 = vector.load %arg3[%c0_41, %c0_42] : memref<8x32xf32, #tpu.memory_space<vmem>>, vector<8x32xf32>
      %c0_43 = arith.constant 0 : index
      %c0_44 = arith.constant 0 : index
      %69 = vector.load %arg13[%c0_43, %c0_44] : memref<8x32xf32, #tpu.memory_space<vmem>>, vector<8x32xf32>
      tpu.vector_store %arg13[%c0_43, %c0_44], %68 {strides = array<i32>} : memref<8x32xf32, #tpu.memory_space<vmem>>, vector<8x32xf32>,
    } else {
    }
    %c0 = arith.constant 0 : index
    %c0_1 = arith.constant 0 : index
    %c0_2 = arith.constant 0 : index
    %3 = vector.load %arg2[%c0, %c0_1, %c0_2] : memref<1x8x32xf32, #tpu.memory_space<vmem>>, vector<1x8x32xf32>
    %4 = vector.shape_cast %3 : vector<1x8x32xf32> to vector<8x32xf32>
    %5 = arith.truncf %4 : vector<8x32xf32> to vector<8x32xbf16>
    %c0_3 = arith.constant 0 : index
    %c0_4 = arith.constant 0 : index
    %6 = vector.load %arg4[%c0_3, %c0_4] : memref<32x32xbf16, #tpu.memory_space<vmem>>, vector<32x32xbf16>
    %cst = arith.constant dense<0.000000e+00> : vector<8x32xf32>
    %7 = tpu.matmul %5, %6, %cst {dimension_numbers = #tpu.dot_dimension_numbers<[1], [0], [0], [1], [0, 0, 1, 1], [], []>} : vector<8x32xbf16>, vector<32x32xbf16>, vector<8x32xf32> -> vector<8x32xf32>
    %c0_5 = arith.constant 0 : index
    %c0_6 = arith.constant 0 : index
    %8 = vector.load %arg5[%c0_5, %c0_6] : memref<1x32xf32, #tpu.memory_space<vmem>>, vector<1x32xf32>
    %9 = vector.broadcast %8 : vector<1x32xf32> to vector<8x32xf32>
    %10 = arith.addf %7, %9 : vector<8x32xf32>
    %cst_7 = arith.constant 0.000000e+00 : f32
    %11 = vector.broadcast %cst_7 : f32 to vector<8x32xf32>
    %12 = arith.maximumf %10, %11 : vector<8x32xf32>
    %c0_8 = arith.constant 0 : index
    %c0_9 = arith.constant 0 : index
    %13 = vector.load %arg6[%c0_8, %c0_9] : memref<64x96xbf16, #tpu.memory_space<vmem>>, vector<64x96xbf16>
    %c0_10 = arith.constant 0 : index
    %c0_11 = arith.constant 0 : index
    %14 = vector.load %arg8[%c0_10, %c0_11] : memref<32x32xbf16, #tpu.memory_space<vmem>>, vector<32x32xbf16>
    %c0_12 = arith.constant 0 : index
    %c0_13 = arith.constant 0 : index
    %15 = vector.load %arg7[%c0_12, %c0_13] : memref<1x96xf32, #tpu.memory_space<vmem>>, vector<1x96xf32>
    %16 = vector.shape_cast %15 : vector<1x96xf32> to vector<1x96xf32>
    %17 = vector.broadcast %16 : vector<1x96xf32> to vector<8x96xf32>
    %c0_14 = arith.constant 0 : index
    %c0_15 = arith.constant 0 : index
    %18 = vector.load %arg9[%c0_14, %c0_15] : memref<1x32xf32, #tpu.memory_space<vmem>>, vector<1x32xf32>
    %19 = vector.shape_cast %18 : vector<1x32xf32> to vector<1x32xf32>
    %20 = vector.broadcast %19 : vector<1x32xf32> to vector<8x32xf32>
    %c0_16 = arith.constant 0 : index
    %c0_17 = arith.constant 0 : index
    %21 = vector.load %arg13[%c0_16, %c0_17] : memref<8x32xf32, #tpu.memory_space<vmem>>, vector<8x32xf32>
    %22 = arith.truncf %21 : vector<8x32xf32> to vector<8x32xbf16>
    %23 = tpu.concatenate %12, %21 in 1 : vector<8x32xf32>, vector<8x32xf32> -> vector<8x64xf32>
    %24 = arith.truncf %23 : vector<8x64xf32> to vector<8x64xbf16>
    %cst_18 = arith.constant dense<0.000000e+00> : vector<8x96xf32>
    %25 = tpu.matmul %24, %13, %cst_18 {dimension_numbers = #tpu.dot_dimension_numbers<[1], [0], [0], [1], [0, 0, 1, 1], [], []>} : vector<8x64xbf16>, vector<64x96xbf16>, vector<8x96xf32> -> vector<8x96xf32>
    %26 = arith.addf %25, %17 : vector<8x96xf32>
    %cst_19 = arith.constant dense<0.000000e+00> : vector<8x32xf32>
    %27 = tpu.matmul %22, %14, %cst_19 {dimension_numbers = #tpu.dot_dimension_numbers<[1], [0], [0], [1], [0, 0, 1, 1], [], []>} : vector<8x32xbf16>, vector<32x32xbf16>, vector<8x32xf32> -> vector<8x32xf32>
    %28 = arith.addf %27, %20 : vector<8x32xf32>
    %29 = vector.extract_strided_slice %26 {offsets = [0, 0], sizes = [8, 32], strides = [1, 1]} : vector<8x96xf32> to vector<8x32xf32>
    %30 = arith.negf %29 : vector<8x32xf32>
    %31 = math.exp %30 : vector<8x32xf32>
    %cst_20 = arith.constant 1.000000e+00 : f32
    %32 = vector.broadcast %cst_20 : f32 to vector<8x32xf32>
    %33 = arith.addf %32, %31 : vector<8x32xf32>
    %34 = arith.divf %32, %33 : vector<8x32xf32>
    %35 = vector.extract_strided_slice %26 {offsets = [0, 32], sizes = [8, 32], strides = [1, 1]} : vector<8x96xf32> to vector<8x32xf32>
    %36 = arith.negf %35 : vector<8x32xf32>
    %37 = math.exp %36 : vector<8x32xf32>
    %cst_21 = arith.constant 1.000000e+00 : f32
    %38 = vector.broadcast %cst_21 : f32 to vector<8x32xf32>
    %39 = arith.addf %38, %37 : vector<8x32xf32>
    %40 = arith.divf %38, %39 : vector<8x32xf32>
    %41 = vector.extract_strided_slice %26 {offsets = [0, 64], sizes = [8, 32], strides = [1, 1]} : vector<8x96xf32> to vector<8x32xf32>
    %42 = arith.mulf %34, %28 : vector<8x32xf32>
    %43 = arith.addf %41, %42 : vector<8x32xf32>
    %44 = math.tanh %43 : vector<8x32xf32>
    %cst_22 = arith.constant 1.000000e+00 : f32
    %45 = vector.broadcast %cst_22 : f32 to vector<8x32xf32>
    %46 = arith.subf %45, %40 : vector<8x32xf32>
    %47 = arith.mulf %46, %44 : vector<8x32xf32>
    %48 = arith.mulf %40, %21 : vector<8x32xf32>
    %49 = arith.addf %47, %48 : vector<8x32xf32>
    %c0_23 = arith.constant 0 : index
    %c0_24 = arith.constant 0 : index
    %c0_25 = arith.constant 0 : index
    %50 = vector.load %arg14[%c0_23, %c0_24, %c0_25] : memref<1x8x32xf32, #tpu.memory_space<vmem>>, vector<1x8x32xf32>
    %51 = vector.shape_cast %50 : vector<1x8x32xf32> to vector<8x32xf32>
    %52 = vector.shape_cast %49 : vector<8x32xf32> to vector<1x8x32xf32>
    tpu.vector_store %arg14[%c0_23, %c0_24, %c0_25], %52 {strides = array<i32>} : memref<1x8x32xf32, #tpu.memory_space<vmem>>, vector<1x8x32xf32>,
    %c0_26 = arith.constant 0 : index
    %c0_27 = arith.constant 0 : index
    %53 = vector.load %arg13[%c0_26, %c0_27] : memref<8x32xf32, #tpu.memory_space<vmem>>, vector<8x32xf32>
    tpu.vector_store %arg13[%c0_26, %c0_27], %49 {strides = array<i32>} : memref<8x32xf32, #tpu.memory_space<vmem>>, vector<8x32xf32>,
    %c0_28 = arith.constant 0 : index
    %c0_29 = arith.constant 0 : index
    %c0_30 = arith.constant 0 : index
    %54 = vector.load %arg14[%c0_28, %c0_29, %c0_30] : memref<1x8x32xf32, #tpu.memory_space<vmem>>, vector<1x8x32xf32>
    %55 = vector.shape_cast %54 : vector<1x8x32xf32> to vector<8x32xf32>
    %56 = arith.truncf %55 : vector<8x32xf32> to vector<8x32xbf16>
    %c0_31 = arith.constant 0 : index
    %c0_32 = arith.constant 0 : index
    %57 = vector.load %arg10[%c0_31, %c0_32] : memref<32x128xbf16, #tpu.memory_space<vmem>>, vector<32x128xbf16>
    %cst_33 = arith.constant dense<0.000000e+00> : vector<8x128xf32>
    %58 = tpu.matmul %56, %57, %cst_33 {dimension_numbers = #tpu.dot_dimension_numbers<[1], [0], [0], [1], [0, 0, 1, 1], [], []>} : vector<8x32xbf16>, vector<32x128xbf16>, vector<8x128xf32> -> vector<8x128xf32>
    %c0_34 = arith.constant 0 : index
    %c0_35 = arith.constant 0 : index
    %59 = vector.load %arg11[%c0_34, %c0_35] : memref<1x128xf32, #tpu.memory_space<vmem>>, vector<1x128xf32>
    %60 = vector.broadcast %59 : vector<1x128xf32> to vector<8x128xf32>
    %61 = arith.addf %58, %60 : vector<8x128xf32>
    %cst_36 = arith.constant -5.000000e+00 : f32
    %cst_37 = arith.constant 2.000000e+00 : f32
    %62 = vector.broadcast %cst_36 : f32 to vector<8x128xf32>
    %63 = arith.maximumf %62, %61 : vector<8x128xf32>
    %64 = vector.broadcast %cst_37 : f32 to vector<8x128xf32>
    %65 = arith.minimumf %64, %63 : vector<8x128xf32>
    %66 = vector.shape_cast %65 : vector<8x128xf32> to vector<1x8x128xf32>
    %c0_38 = arith.constant 0 : index
    %c0_39 = arith.constant 0 : index
    %c0_40 = arith.constant 0 : index
    %67 = vector.load %arg12[%c0_38, %c0_39, %c0_40] : memref<1x8x128xf32, #tpu.memory_space<vmem>>, vector<1x8x128xf32>
    tpu.vector_store %arg12[%c0_38, %c0_39, %c0_40], %66 {strides = array<i32>} : memref<1x8x128xf32, #tpu.memory_space<vmem>>, vector<1x8x128xf32>,
    return
  }
  func.func @transform_0(%arg0: i32, %arg1: i32) -> (i32, i32, i32) {
    %c0_i32 = arith.constant 0 : i32
    %c0_i32_0 = arith.constant 0 : i32
    return %arg1, %arg0, %c0_i32 : i32, i32, i32
  }
  func.func @transform_1(%arg0: i32, %arg1: i32) -> (i32, i32) {
    %c0_i32 = arith.constant 0 : i32
    %c0_i32_0 = arith.constant 0 : i32
    return %arg0, %c0_i32 : i32, i32
  }
  func.func @transform_2(%arg0: i32, %arg1: i32) -> (i32, i32) {
    %c0_i32 = arith.constant 0 : i32
    %c0_i32_0 = arith.constant 0 : i32
    %c0_i32_1 = arith.constant 0 : i32
    return %c0_i32, %c0_i32_0 : i32, i32
  }
  func.func @transform_3(%arg0: i32, %arg1: i32) -> (i32, i32) {
    %c0_i32 = arith.constant 0 : i32
    %c0_i32_0 = arith.constant 0 : i32
    %c0_i32_1 = arith.constant 0 : i32
    return %c0_i32, %c0_i32_0 : i32, i32
  }
  func.func @transform_4(%arg0: i32, %arg1: i32) -> (i32, i32) {
    %c0_i32 = arith.constant 0 : i32
    %c0_i32_0 = arith.constant 0 : i32
    %c0_i32_1 = arith.constant 0 : i32
    return %c0_i32, %c0_i32_0 : i32, i32
  }
  func.func @transform_5(%arg0: i32, %arg1: i32) -> (i32, i32) {
    %c0_i32 = arith.constant 0 : i32
    %c0_i32_0 = arith.constant 0 : i32
    %c0_i32_1 = arith.constant 0 : i32
    return %c0_i32, %c0_i32_0 : i32, i32
  }
  func.func @transform_6(%arg0: i32, %arg1: i32) -> (i32, i32) {
    %c0_i32 = arith.constant 0 : i32
    %c0_i32_0 = arith.constant 0 : i32
    %c0_i32_1 = arith.constant 0 : i32
    return %c0_i32, %c0_i32_0 : i32, i32
  }
  func.func @transform_7(%arg0: i32, %arg1: i32) -> (i32, i32) {
    %c0_i32 = arith.constant 0 : i32
    %c0_i32_0 = arith.constant 0 : i32
    %c0_i32_1 = arith.constant 0 : i32
    return %c0_i32, %c0_i32_0 : i32, i32
  }
  func.func @transform_8(%arg0: i32, %arg1: i32) -> (i32, i32) {
    %c0_i32 = arith.constant 0 : i32
    %c0_i32_0 = arith.constant 0 : i32
    %c0_i32_1 = arith.constant 0 : i32
    return %c0_i32, %c0_i32_0 : i32, i32
  }
  func.func @transform_9(%arg0: i32, %arg1: i32) -> (i32, i32) {
    %c0_i32 = arith.constant 0 : i32
    %c0_i32_0 = arith.constant 0 : i32
    %c0_i32_1 = arith.constant 0 : i32
    return %c0_i32, %c0_i32_0 : i32, i32
  }
  func.func @transform_10(%arg0: i32, %arg1: i32) -> (i32, i32, i32) {
    %c0_i32 = arith.constant 0 : i32
    %c0_i32_0 = arith.constant 0 : i32
    return %arg1, %arg0, %c0_i32 : i32, i32, i32
  }
  func.func @transform_11(%arg0: i32, %arg1: i32) -> (i32, i32) {
    %c0_i32 = arith.constant 0 : i32
    %c0_i32_0 = arith.constant 0 : i32
    return %arg0, %c0_i32 : i32, i32
  }
}

</mosaic_0001>

<llo_original>
// kernel: rnn_policy_rollout.1
$region0: #{rnn_policy_rollout.1}
  #allocation0 [shape = 'u32[]', space=smem, size = 0x4, offset = 0x4, fixed_abs, tag = 'smem constant byte address 0x4 - core index']
  #allocation1 [shape = 'u32[144,128]{1,0:T(1,128)}', space=vmem, size = 0x12000, scoped, tag = 'internal scratch']
  #allocation2 [shape = 'f32[1,8,32]{2,1,0:T(8,128)}', space=vmem, size = 0x1000, scoped, tag = 'scratch operand']
  %s0 = inlined_call_operand.vmem [shape: f32[1,8,32], index: 0, kind: input, shape index: {}]
  %s1 = inlined_call_operand.vmem [shape: f32[8,32], index: 1, kind: input, shape index: {}, may-alias: {1,11}]
  %s2 = inlined_call_operand.vmem [shape: bf16[32,32], index: 2, kind: input, shape index: {}]
  %s3 = inlined_call_operand.vmem [shape: f32[1,32], index: 3, kind: input, shape index: {}]
  %s4 = inlined_call_operand.vmem [shape: bf16[64,96], index: 4, kind: input, shape index: {}]
  %s5 = inlined_call_operand.vmem [shape: f32[1,96], index: 5, kind: input, shape index: {}]
  %s6 = inlined_call_operand.vmem [shape: bf16[32,32], index: 6, kind: input, shape index: {}]
  %s7 = inlined_call_operand.vmem [shape: f32[1,32], index: 7, kind: input, shape index: {}]
  %s8 = inlined_call_operand.vmem [shape: bf16[32,128], index: 8, kind: input, shape index: {}]
  %s9 = inlined_call_operand.vmem [shape: f32[1,128], index: 9, kind: input, shape index: {}]
  %s10 = inlined_call_operand.vmem [shape: f32[1,8,128], index: 10, kind: output, shape index: {0}]
  %s11 = inlined_call_operand.vmem [shape: f32[8,32], index: 11, kind: output, shape index: {1}, may-alias: {1,11}]
  %12 = xla_tuple %s10, %s11
  %s13 = sld [smem:[#allocation0]]
  $region62: #{rnn_policy_rollout.1} parent=0
    _
  %s15 = ssub.s32 1, %s13
  %s16 = scalar_select 0, %s15, %s13
  // Predicated region
  $region2: #{rnn_policy_rollout.1} parent=0 // pred_check
    _
  $region3: #{rnn_policy_rollout.1} parent=0 // pred_check_branch
    %18 = sbr.rel (0) target = $region5
  $region4: #{rnn_policy_rollout.1} parent=0 // pred_region
    _
  $region5: #{rnn_policy_rollout.1} parent=0 // pred_fallthru
    _
  // Predicated region
  $region6: #{rnn_policy_rollout.1} parent=0 // pred_check
    _
  $region7: #{rnn_policy_rollout.1} parent=0 // pred_check_branch
    %20 = sbr.rel (0) target = $region9
  $region8: #{rnn_policy_rollout.1} parent=0 // pred_region
    _
  $region9: #{rnn_policy_rollout.1} parent=0 // pred_fallthru
    _
  // Predicated region
  $region10: #{rnn_policy_rollout.1} parent=0 // pred_check
    _
  $region11: #{rnn_policy_rollout.1} parent=0 // pred_check_branch
    %22 = sbr.rel (0) target = $region13
  $region12: #{rnn_policy_rollout.1} parent=0 // pred_region
    _
  $region13: #{rnn_policy_rollout.1} parent=0 // pred_fallthru
    _
  // Predicated region
  $region14: #{rnn_policy_rollout.1} parent=0 // pred_check
    _
  $region15: #{rnn_policy_rollout.1} parent=0 // pred_check_branch
    %24 = sbr.rel (0) target = $region17
  $region16: #{rnn_policy_rollout.1} parent=0 // pred_region
    _
  $region17: #{rnn_policy_rollout.1} parent=0 // pred_fallthru
    _
  // Predicated region
  $region18: #{rnn_policy_rollout.1} parent=0 // pred_check
    _
  $region19: #{rnn_policy_rollout.1} parent=0 // pred_check_branch
    %26 = sbr.rel (0) target = $region21
  $region20: #{rnn_policy_rollout.1} parent=0 // pred_region
    _
  $region21: #{rnn_policy_rollout.1} parent=0 // pred_fallthru
    _
  // Predicated region
  $region22: #{rnn_policy_rollout.1} parent=0 // pred_check
    _
  $region23: #{rnn_policy_rollout.1} parent=0 // pred_check_branch
    %28 = sbr.rel (0) target = $region25
  $region24: #{rnn_policy_rollout.1} parent=0 // pred_region
    _
  $region25: #{rnn_policy_rollout.1} parent=0 // pred_fallthru
    _
  // Predicated region
  $region26: #{rnn_policy_rollout.1} parent=0 // pred_check
    _
  $region27: #{rnn_policy_rollout.1} parent=0 // pred_check_branch
    %30 = sbr.rel (0) target = $region29
  $region28: #{rnn_policy_rollout.1} parent=0 // pred_region
    _
  $region29: #{rnn_policy_rollout.1} parent=0 // pred_fallthru
    _
  // Predicated region
  $region30: #{rnn_policy_rollout.1} parent=0 // pred_check
    _
  $region31: #{rnn_policy_rollout.1} parent=0 // pred_check_branch
    %32 = sbr.rel (0) target = $region33
  $region32: #{rnn_policy_rollout.1} parent=0 // pred_region
    _
  $region33: #{rnn_policy_rollout.1} parent=0 // pred_fallthru
    _
  // Predicated region
  $region34: #{rnn_policy_rollout.1} parent=0 // pred_check
    _
  $region35: #{rnn_policy_rollout.1} parent=0 // pred_check_branch
    %34 = sbr.rel (0) target = $region37
  $region36: #{rnn_policy_rollout.1} parent=0 // pred_region
    _
  $region37: #{rnn_policy_rollout.1} parent=0 // pred_fallthru
    _
  // Predicated region
  $region38: #{rnn_policy_rollout.1} parent=0 // pred_check
    _
  $region39: #{rnn_policy_rollout.1} parent=0 // pred_check_branch
    %36 = sbr.rel (0) target = $region41
  $region40: #{rnn_policy_rollout.1} parent=0 // pred_region
    _
  $region41: #{rnn_policy_rollout.1} parent=0 // pred_fallthru
    _
  %p38 = scmp.eq.s32.totalorder 0, 0
  // Predicated region
  $region42: #{rnn_policy_rollout.1} parent=0 // pred_check
    %p39 = pneg %p38
  $region43: #{rnn_policy_rollout.1} parent=0 // pred_check_branch
    %41 = sbr.rel (%p39) target = $region45
  $region44: #{rnn_policy_rollout.1} parent=0 // pred_region
    %v42 = vld [vmem:[%s1] sm:$0xff]
    %vm43 = vcmask 261120
    %44 = vst.msk [vmem:[%s11] sm:$0xff] %vm43, %v42
  $region45: #{rnn_policy_rollout.1} parent=0 // pred_fallthru
    _
  %v45 = vld [vmem:[%s0] sm:$0xff]
  %v46 = vpack.c.bf16 %v45, %v45
  %v47 = vld [vmem:[%s2] sm:$0xf]
  %v48 = vld [vmem:[%s2 + $0x4] sm:$0xf]
  %v49 = vld [vmem:[%s2 + $0x8] sm:$0xf]
  %v50 = vld [vmem:[%s2 + $0xc] sm:$0xf]
  %v51 = vld [vmem:[%s3] sm:$0x1]
  %v53 = vlaneseq
  %v54 = vshrl.u32 %v53, 7
  %v55 = vsub.s32 0, %v54
  %v56 = vrot.slane %v51, %v55
  %v62 = vunpack.c.l.b16 %v47
  %v63 = vunpack.c.l.b16 %v48
  %v64 = vunpack.c.l.b16 %v49
  %v65 = vunpack.c.l.b16 %v50
  %v66 = vpack.c.b16 %v63, %v62
  %v67 = vpack.c.b16 %v65, %v64
  %vm70 = vcmask 261120
  %v72 = vsel %vm70, %v46, 0
  %74 = vmatprep.subr.bf16.mxu0 0
  %75 = vmatpush1.bf16.msra.mxu0 0
  %76 = vmatprep.subr.bf16.mxu0 0
  %77 = vmatpush1.bf16.msra.mxu0 0
  %78 = vmatprep.subr.bf16.mxu0 0
  %79 = vmatpush1.bf16.msra.mxu0 0
  %80 = vmatprep.subr.bf16.mxu0 0
  %81 = vmatpush1.bf16.msra.mxu0 0
  %82 = vmatprep.subr.bf16.mxu0 0
  %83 = vmatpush1.bf16.msra.mxu0 0
  %84 = vmatprep.subr.bf16.mxu0 0
  %85 = vmatpush1.bf16.msra.mxu0 0
  %86 = vmatprep.subr.bf16.mxu0 0
  %87 = vmatpush1.bf16.msra.mxu0 %v67
  %88 = vmatprep.subr.bf16.mxu0 0
  %89 = vmatpush1.bf16.msra.mxu0 %v66
  %90 = vmatprep.subr.bf16.mxu0 0
  %91 = vmatpush2.bf16.msra.mxu0 0
  %92 = vmatprep.subr.bf16.mxu0 0
  %93 = vmatpush2.bf16.msra.mxu0 0
  %94 = vmatprep.subr.bf16.mxu0 0
  %95 = vmatpush2.bf16.msra.mxu0 0
  %96 = vmatprep.subr.bf16.mxu0 0
  %97 = vmatpush2.bf16.msra.mxu0 0
  %98 = vmatprep.subr.bf16.mxu0 0
  %99 = vmatpush2.bf16.msra.mxu0 0
  %100 = vmatprep.subr.bf16.mxu0 0
  %101 = vmatpush2.bf16.msra.mxu0 0
  %102 = vmatprep.subr.bf16.mxu0 0
  %103 = vmatpush2.bf16.msra.mxu0 0
  %104 = vmatprep.subr.bf16.mxu0 0
  %105 = vmatpush2.bf16.msra.mxu0 0
  %106 = vmatprep.mubr.bf16.mxu0 0
  %107 = vmatmul.mubr.bf16.gmra.mxu0 %v72
  %v108 = vpop.f32.mrf.mxu0
  %v109 = vadd.f32 %v56, %v108
  %v110 = vpop.f32.mrf.mxu0
  %v111 = vpop.f32.mrf.mxu0
  %v112 = vpop.f32.mrf.mxu0
  %113 = vdwg.mxu0
  %v114 = vmax.f32 %v109, 0.0
  %v115 = vld [vmem:[%s4] sm:$0xf]
  %v116 = vld [vmem:[%s4 + $0x4] sm:$0xf]
  %v117 = vld [vmem:[%s4 + $0x8] sm:$0xf]
  %v118 = vld [vmem:[%s4 + $0xc] sm:$0xf]
  %v119 = vld [vmem:[%s4 + $0x10] sm:$0xf]
  %v120 = vld [vmem:[%s4 + $0x14] sm:$0xf]
  %v121 = vld [vmem:[%s4 + $0x18] sm:$0xf]
  %v122 = vld [vmem:[%s4 + $0x1c] sm:$0xf]
  %v123 = vld [vmem:[%s6] sm:$0xf]
  %v124 = vld [vmem:[%s6 + $0x4] sm:$0xf]
  %v125 = vld [vmem:[%s6 + $0x8] sm:$0xf]
  %v126 = vld [vmem:[%s6 + $0xc] sm:$0xf]
  %v127 = vld [vmem:[%s5] sm:$0x1]
  %v129 = vlaneseq
  %v130 = vshrl.u32 %v129, 7
  %v131 = vsub.s32 0, %v130
  %v132 = vrot.slane %v127, %v131
  %v134 = vld [vmem:[%s7] sm:$0x1]
  %v136 = vlaneseq
  %v137 = vshrl.u32 %v136, 7
  %v138 = vsub.s32 0, %v137
  %v139 = vrot.slane %v134, %v138
  %v141 = vld [vmem:[%s11] sm:$0xff]
  %v142 = vpack.c.bf16 %v141, %v141
  %144 = vrot.lane.b32.xlu0 %v141, 32
  %v145 = vpop.permute.xlu0 %144
  %v147 = vsel %vm70, %v114, %v145
  %v148 = vpack.c.bf16 %v147, %v147
  %v157 = vunpack.c.l.b16 %v115
  %v158 = vunpack.c.l.b16 %v116
  %v159 = vunpack.c.l.b16 %v117
  %v160 = vunpack.c.l.b16 %v118
  %v161 = vunpack.c.l.b16 %v119
  %v162 = vunpack.c.l.b16 %v120
  %v163 = vunpack.c.l.b16 %v121
  %v164 = vunpack.c.l.b16 %v122
  %v165 = vpack.c.b16 %v158, %v157
  %v166 = vpack.c.b16 %v160, %v159
  %v167 = vpack.c.b16 %v162, %v161
  %v168 = vpack.c.b16 %v164, %v163
  %vm173 = vcmask 523264
  %v175 = vsel %vm173, %v148, 0
  %177 = vmatprep.subr.bf16.mxu0 0
  %178 = vmatpush1.bf16.msra.mxu0 0
  %179 = vmatprep.subr.bf16.mxu0 0
  %180 = vmatpush1.bf16.msra.mxu0 0
  %181 = vmatprep.subr.bf16.mxu0 0
  %182 = vmatpush1.bf16.msra.mxu0 0
  %183 = vmatprep.subr.bf16.mxu0 0
  %184 = vmatpush1.bf16.msra.mxu0 0
  %185 = vmatprep.subr.bf16.mxu0 0
  %186 = vmatpush1.bf16.msra.mxu0 %v168
  %187 = vmatprep.subr.bf16.mxu0 0
  %188 = vmatpush1.bf16.msra.mxu0 %v167
  %189 = vmatprep.subr.bf16.mxu0 0
  %190 = vmatpush1.bf16.msra.mxu0 %v166
  %191 = vmatprep.subr.bf16.mxu0 0
  %192 = vmatpush1.bf16.msra.mxu0 %v165
  %193 = vmatprep.subr.bf16.mxu0 0
  %194 = vmatpush2.bf16.msra.mxu0 0
  %195 = vmatprep.subr.bf16.mxu0 0
  %196 = vmatpush2.bf16.msra.mxu0 0
  %197 = vmatprep.subr.bf16.mxu0 0
  %198 = vmatpush2.bf16.msra.mxu0 0
  %199 = vmatprep.subr.bf16.mxu0 0
  %200 = vmatpush2.bf16.msra.mxu0 0
  %201 = vmatprep.subr.bf16.mxu0 0
  %202 = vmatpush2.bf16.msra.mxu0 0
  %203 = vmatprep.subr.bf16.mxu0 0
  %204 = vmatpush2.bf16.msra.mxu0 0
  %205 = vmatprep.subr.bf16.mxu0 0
  %206 = vmatpush2.bf16.msra.mxu0 0
  %207 = vmatprep.subr.bf16.mxu0 0
  %208 = vmatpush2.bf16.msra.mxu0 0
  %209 = vmatprep.mubr.bf16.mxu0 0
  %210 = vmatmul.mubr.bf16.gmra.mxu0 %v175
  %v211 = vpop.f32.mrf.mxu0
  %v212 = vadd.f32 %v132, %v211
  %v213 = vpop.f32.mrf.mxu0
  %v214 = vpop.f32.mrf.mxu0
  %v215 = vpop.f32.mrf.mxu0
  %216 = vdwg.mxu0
  %v221 = vunpack.c.l.b16 %v123
  %v222 = vunpack.c.l.b16 %v124
  %v223 = vunpack.c.l.b16 %v125
  %v224 = vunpack.c.l.b16 %v126
  %v225 = vpack.c.b16 %v222, %v221
  %v226 = vpack.c.b16 %v224, %v223
  %v230 = vsel %vm70, %v142, 0
  %232 = vmatprep.subr.bf16.mxu0 0
  %233 = vmatpush1.bf16.msra.mxu0 0
  %234 = vmatprep.subr.bf16.mxu0 0
  %235 = vmatpush1.bf16.msra.mxu0 0
  %236 = vmatprep.subr.bf16.mxu0 0
  %237 = vmatpush1.bf16.msra.mxu0 0
  %238 = vmatprep.subr.bf16.mxu0 0
  %239 = vmatpush1.bf16.msra.mxu0 0
  %240 = vmatprep.subr.bf16.mxu0 0
  %241 = vmatpush1.bf16.msra.mxu0 0
  %242 = vmatprep.subr.bf16.mxu0 0
  %243 = vmatpush1.bf16.msra.mxu0 0
  %244 = vmatprep.subr.bf16.mxu0 0
  %245 = vmatpush1.bf16.msra.mxu0 %v226
  %246 = vmatprep.subr.bf16.mxu0 0
  %247 = vmatpush1.bf16.msra.mxu0 %v225
  %248 = vmatprep.subr.bf16.mxu0 0
  %249 = vmatpush2.bf16.msra.mxu0 0
  %250 = vmatprep.subr.bf16.mxu0 0
  %251 = vmatpush2.bf16.msra.mxu0 0
  %252 = vmatprep.subr.bf16.mxu0 0
  %253 = vmatpush2.bf16.msra.mxu0 0
  %254 = vmatprep.subr.bf16.mxu0 0
  %255 = vmatpush2.bf16.msra.mxu0 0
  %256 = vmatprep.subr.bf16.mxu0 0
  %257 = vmatpush2.bf16.msra.mxu0 0
  %258 = vmatprep.subr.bf16.mxu0 0
  %259 = vmatpush2.bf16.msra.mxu0 0
  %260 = vmatprep.subr.bf16.mxu0 0
  %261 = vmatpush2.bf16.msra.mxu0 0
  %262 = vmatprep.subr.bf16.mxu0 0
  %263 = vmatpush2.bf16.msra.mxu0 0
  %264 = vmatprep.mubr.bf16.mxu0 0
  %265 = vmatmul.mubr.bf16.gmra.mxu0 %v230
  %v266 = vpop.f32.mrf.mxu0
  %v267 = vadd.f32 %v139, %v266
  %v268 = vpop.f32.mrf.mxu0
  %v269 = vpop.f32.mrf.mxu0
  %v270 = vpop.f32.mrf.mxu0
  %271 = vdwg.mxu0
  %v272 = vxor.u32 %v212, 2147483648
  %v273 = vmul.f32 %v272, 1.442695
  %v274 = vpow.pop %v273
  %v275 = vadd.f32 %v274, 1.0
  %v276 = vrcp.pop %v275
  %v277 = vmul.f32 1.0, %v276
  %v278 = vmul.f32 %v277, %v267
  %280 = vrot.lane.b32.xlu0 %v278, 64
  %v281 = vpop.permute.xlu0 %280
  %v283 = vadd.f32 %v212, %v281
  %v284 = vtanh.pop %v283
  %v285 = vsub.f32 1.0, %v277
  %287 = vrot.lane.b32.xlu0 %v284, 96
  %v288 = vpop.permute.xlu0 %287
  %v290 = vmul.f32 %v285, %v288
  %v291 = vmul.f32 %v277, %v145
  %v292 = vadd.f32 %v290, %v291
  %294 = vrot.lane.b32.xlu0 %v292, 96
  %v295 = vpop.permute.xlu0 %294
  %297 = vst.msk [vmem:[#allocation2] sm:$0xff] %vm70, %v295
  %298 = vst.msk [vmem:[%s11] sm:$0xff] %vm70, %v295
  %v299 = vld [vmem:[#allocation2] sm:$0xff]
  %v300 = vpack.c.bf16 %v299, %v299
  %v301 = vld [vmem:[%s8] sm:$0xf]
  %v302 = vld [vmem:[%s8 + $0x4] sm:$0xf]
  %v303 = vld [vmem:[%s8 + $0x8] sm:$0xf]
  %v304 = vld [vmem:[%s8 + $0xc] sm:$0xf]
  %v305 = vld [vmem:[%s9] sm:$0x1]
  %v307 = vlaneseq
  %v308 = vshrl.u32 %v307, 7
  %v309 = vsub.s32 0, %v308
  %v310 = vrot.slane %v305, %v309
  %v316 = vunpack.c.l.b16 %v301
  %v317 = vunpack.c.l.b16 %v302
  %v318 = vunpack.c.l.b16 %v303
  %v319 = vunpack.c.l.b16 %v304
  %v320 = vpack.c.b16 %v317, %v316
  %v321 = vpack.c.b16 %v319, %v318
  %v325 = vsel %vm70, %v300, 0
  %327 = vmatprep.subr.bf16.mxu0 0
  %328 = vmatpush1.bf16.msra.mxu0 0
  %329 = vmatprep.subr.bf16.mxu0 0
  %330 = vmatpush1.bf16.msra.mxu0 0
  %331 = vmatprep.subr.bf16.mxu0 0
  %332 = vmatpush1.bf16.msra.mxu0 0
  %333 = vmatprep.subr.bf16.mxu0 0
  %334 = vmatpush1.bf16.msra.mxu0 0
  %335 = vmatprep.subr.bf16.mxu0 0
  %336 = vmatpush1.bf16.msra.mxu0 0
  %337 = vmatprep.subr.bf16.mxu0 0
  %338 = vmatpush1.bf16.msra.mxu0 0
  %339 = vmatprep.subr.bf16.mxu0 0
  %340 = vmatpush1.bf16.msra.mxu0 %v321
  %341 = vmatprep.subr.bf16.mxu0 0
  %342 = vmatpush1.bf16.msra.mxu0 %v320
  %343 = vmatprep.subr.bf16.mxu0 0
  %344 = vmatpush2.bf16.msra.mxu0 0
  %345 = vmatprep.subr.bf16.mxu0 0
  %346 = vmatpush2.bf16.msra.mxu0 0
  %347 = vmatprep.subr.bf16.mxu0 0
  %348 = vmatpush2.bf16.msra.mxu0 0
  %349 = vmatprep.subr.bf16.mxu0 0
  %350 = vmatpush2.bf16.msra.mxu0 0
  %351 = vmatprep.subr.bf16.mxu0 0
  %352 = vmatpush2.bf16.msra.mxu0 0
  %353 = vmatprep.subr.bf16.mxu0 0
  %354 = vmatpush2.bf16.msra.mxu0 0
  %355 = vmatprep.subr.bf16.mxu0 0
  %356 = vmatpush2.bf16.msra.mxu0 0
  %357 = vmatprep.subr.bf16.mxu0 0
  %358 = vmatpush2.bf16.msra.mxu0 0
  %359 = vmatprep.mubr.bf16.mxu0 0
  %360 = vmatmul.mubr.bf16.gmra.mxu0 %v325
  %v361 = vpop.f32.mrf.mxu0
  %v362 = vadd.f32 %v310, %v361
  %v363 = vpop.f32.mrf.mxu0
  %v364 = vpop.f32.mrf.mxu0
  %v365 = vpop.f32.mrf.mxu0
  %366 = vdwg.mxu0
  %v367 = vmax.f32 %v362, -5.0
  %v368 = vmin.f32 %v367, 2.0
  %369 = vst [vmem:[%s10] sm:$0xff] %v368
  // Predicated region
  $region46: #{rnn_policy_rollout.1} parent=0 // pred_check
    _
  $region47: #{rnn_policy_rollout.1} parent=0 // pred_check_branch
    %371 = sbr.rel (0) target = $region49
  $region48: #{rnn_policy_rollout.1} parent=0 // pred_region
    _
  $region49: #{rnn_policy_rollout.1} parent=0 // pred_fallthru
    _
  // Predicated region
  $region50: #{rnn_policy_rollout.1} parent=0 // pred_check
    _
  $region51: #{rnn_policy_rollout.1} parent=0 // pred_check_branch
    %373 = sbr.rel (0) target = $region53
  $region52: #{rnn_policy_rollout.1} parent=0 // pred_region
    _
  $region53: #{rnn_policy_rollout.1} parent=0 // pred_fallthru
    _
  // Predicated region
  $region54: #{rnn_policy_rollout.1} parent=0 // pred_check
    _
  $region55: #{rnn_policy_rollout.1} parent=0 // pred_check_branch
    %375 = sbr.rel (0) target = $region57
  $region56: #{rnn_policy_rollout.1} parent=0 // pred_region
    _
  $region57: #{rnn_policy_rollout.1} parent=0 // pred_fallthru
    _
  // Predicated region
  $region58: #{rnn_policy_rollout.1} parent=0 // pred_check
    _
  $region59: #{rnn_policy_rollout.1} parent=0 // pred_check_branch
    %377 = sbr.rel (0) target = $region61
  $region60: #{rnn_policy_rollout.1} parent=0 // pred_region
    _
  $region61: #{rnn_policy_rollout.1} parent=0 // pred_fallthru
    _

</llo_original>
